<compile_context>
chip_gen: v7x
topology: tpu7x:2x2x1
jax: 0.10.0
libtpu: 0.0.40
codegen_flags: <defaults>
</compile_context>

<pallas_src>
import functools

import jax
import jax.numpy as jnp
from jax.experimental import pallas as pl
from jax.experimental.pallas import tpu as pltpu

_ROW_TILE = 512     # rows per grid step for the fused MLP kernels
_EDGE_TILE = 256    # edges per grid step for segment-max
_SEG_TILE = 64      # segment rows per grid step for segment-max


def _round_up(x, m):
    return ((x + m - 1) // m) * m


# ----------------------------- Pallas kernels ------------------------------ #
def _fused_mlp_kernel(*refs, num_layers):
    # refs: x_ref, (w1, b1, w2, b2, ...), o_ref -- all layers applied in VMEM.
    x_ref = refs[0]
    o_ref = refs[-1]
    wb = refs[1:-1]
    y = x_ref[...]
    for l in range(num_layers):
        w = wb[2 * l][...]
        b = wb[2 * l + 1][...]
        y = jnp.maximum(jnp.dot(y, w, preferred_element_type=jnp.float32) + b, 0.0)
    o_ref[...] = y.astype(o_ref.dtype)


def _segment_max_kernel(blk_lo_ref, n_blk_ref, seg_ref, feat_ref, out_ref,
                        acc_ref, *, seg_tile):
    # blk_lo_ref/n_blk_ref: SMEM scalar-prefetch arrays, per segment block the first
    #                       relevant edge block and how many edge blocks to visit.
    # seg_ref : (EDGE_TILE, 1) int32 sorted segment ids (pad value never matches)
    # feat_ref: (EDGE_TILE, D)  f32 features (>= 0 because in_linear ends in ReLU)
    # out_ref : (SEG_TILE, D)   this segment tile's output rows
    # acc_ref : (SEG_TILE, D)   VMEM scratch accumulator
    m = pl.program_id(0)
    e = pl.program_id(1)

    @pl.when(e == 0)
    def _init():
        acc_ref[...] = jnp.zeros_like(acc_ref)          # scatter_max(out=zeros)

    @pl.when(e < n_blk_ref[m])                          # only scan own edge range
    def _compute():
        m_base = m * seg_tile
        seg = seg_ref[...]
        feats = feat_ref[...]
        rows = []
        for r in range(seg_tile):                       # static unroll
            hit = seg == (m_base + r)                   # (EDGE_TILE, 1)
            rows.append(jnp.max(jnp.where(hit, feats, 0.0), axis=0, keepdims=True))
        contribs = jnp.concatenate(rows, axis=0)        # (SEG_TILE, D)
        acc_ref[...] = jnp.maximum(acc_ref[...], contribs)   # one full-tile store

    @pl.when(e == pl.num_programs(1) - 1)
    def _finish():
        out_ref[...] = acc_ref[...]


# ------------------------------ Pallas wrappers ----------------------------- #
def mlp_fused(x, params):
    """relu(...relu(x @ W1 + b1)... @ WL + bL) in one pallas_call."""
    r, k = x.shape
    # pad the first contracting dim to a multiple of 8 (MXU/layout friendly)
    k_pad = _round_up(k, 8)
    w1, b1 = params[0]
    if k_pad != k:
        x = jnp.pad(x, ((0, 0), (0, k_pad - k)))
        w1 = jnp.pad(w1, ((0, k_pad - k), (0, 0)))
    layers = [(w1, b1)] + list(params[1:])

    row_tile = min(_ROW_TILE, _round_up(r, 8))
    rp = _round_up(r, row_tile)
    xp = jnp.pad(x, ((0, rp - r), (0, 0)))
    n_out = layers[-1][0].shape[1]

    in_specs = [pl.BlockSpec((row_tile, k_pad), lambda i: (i, 0))]
    args = [xp]
    for w, b in layers:
        kk, nn = w.shape
        in_specs.append(pl.BlockSpec((kk, nn), lambda i: (0, 0)))
        in_specs.append(pl.BlockSpec((1, nn), lambda i: (0, 0)))
        args += [w, b.reshape(1, nn)]

    out = pl.pallas_call(
        functools.partial(_fused_mlp_kernel, num_layers=len(layers)),
        out_shape=jax.ShapeDtypeStruct((rp, n_out), jnp.float32),
        grid_spec=pltpu.PrefetchScalarGridSpec(
            num_scalar_prefetch=0,
            grid=(rp // row_tile,),
            in_specs=in_specs,
            out_specs=pl.BlockSpec((row_tile, n_out), lambda i: (i, 0))),
        compiler_params=pltpu.CompilerParams(dimension_semantics=("parallel",)),
    )(*args)
    return out[:r]


def segment_max_sorted(features, segment_ids, num_segments):
    """Zero-initialised scatter_max of `features` rows into (num_segments, D).

    `segment_ids` MUST be sorted ascending (the forward sorts the edge list first);
    sorted order lets each segment tile visit only its own edge blocks via
    scalar-prefetched ranges and a data-dependent index_map.
    """
    e, d = features.shape
    edge_tile = min(_EDGE_TILE, _round_up(e, 8))
    ep = _round_up(e, edge_tile)
    seg_tile = min(_SEG_TILE, _round_up(num_segments, 8))
    mp = _round_up(num_segments, seg_tile)
    n_eb = ep // edge_tile
    n_mb = mp // seg_tile

    feats = jnp.pad(features, ((0, ep - e), (0, 0)))
    segs = jnp.pad(segment_ids.astype(jnp.int32), (0, ep - e),
                   constant_values=mp)           # pad ids sort last and never match
    # per-segment-block edge ranges, converted to edge-block indices
    block_starts = jnp.arange(n_mb, dtype=jnp.int32) * seg_tile
    lo = jnp.searchsorted(segs, block_starts, side="left").astype(jnp.int32)
    hi = jnp.searchsorted(segs, block_starts + seg_tile, side="left").astype(jnp.int32)
    blk_lo_raw = lo // edge_tile
    blk_hi = (jnp.maximum(hi, 1) - 1) // edge_tile
    n_blk = jnp.where(hi > lo, blk_hi - blk_lo_raw + 1, 0).astype(jnp.int32)
    blk_lo = jnp.minimum(blk_lo_raw, n_eb - 1).astype(jnp.int32)

    def edge_map(m, eb, blk_lo_ref, n_blk_ref):
        # clamp to the last relevant block: repeated block index => DMA elided
        last = blk_lo_ref[m] + jnp.maximum(n_blk_ref[m] - 1, 0)
        return (jnp.minimum(blk_lo_ref[m] + eb, last), 0)

    out = pl.pallas_call(
        functools.partial(_segment_max_kernel, seg_tile=seg_tile),
        out_shape=jax.ShapeDtypeStruct((mp, d), jnp.float32),
        grid_spec=pltpu.PrefetchScalarGridSpec(
            num_scalar_prefetch=2,
            grid=(n_mb, n_eb),
            in_specs=[pl.BlockSpec((edge_tile, 1), edge_map),
                      pl.BlockSpec((edge_tile, d), edge_map)],
            out_specs=pl.BlockSpec((seg_tile, d),
                                   lambda m, eb, blk_lo, n_blk: (m, 0)),
            scratch_shapes=[pltpu.VMEM((seg_tile, d), jnp.float32)]),
        compiler_params=pltpu.CompilerParams(
            dimension_semantics=("parallel", "arbitrary")),
    )(blk_lo, n_blk, segs.reshape(ep, 1), feats)
    return out[:num_segments]


# ------------------------------ Module (forward) ---------------------------- #
def init_mlp(key, channels):
    """multi_layer_neural_network_fn: [Linear(K[i-1],K[i]) + ReLU] * (len-1)."""
    params = []
    for i in range(1, len(channels)):
        key, kw, kb = jax.random.split(key, 3)
        bound = 1.0 / float(channels[i - 1]) ** 0.5
        w = jax.random.uniform(kw, (channels[i - 1], channels[i]),
                               jnp.float32, -bound, bound)
        b = jax.random.uniform(kb, (channels[i],), jnp.float32, -bound, bound)
        params.append((w, b))
    return params


def init_downsample_block(key, in_inter, out_inter):
    assert in_inter[-1] == out_inter[0]
    k0, k1 = jax.random.split(key)
    return {"in_linear": init_mlp(k0, in_inter),
            "out_linear": init_mlp(k1, out_inter)}


def downsample_block_forward(params, last_coors, last_features, current_coors, edge):
    current_indices = edge[0, :]                 # segments (into current_coors)
    last_indices = edge[1, :]                    # neighbors (into last_*)
    # sort edges by destination segment so segment_max can use contiguous
    # per-segment-tile edge ranges; gathers below then produce h pre-sorted.
    order = jnp.argsort(current_indices)
    ci = jnp.take(current_indices, order).astype(jnp.int32)
    li = jnp.take(last_indices, order)

    # gather + relative-coordinate concat (single (E, f+3) stream; rel precomputed
    # so the neighbor/center coordinate streams are merged before the kernel)
    x = jnp.concatenate(
        [jnp.take(last_features, li, axis=0),
         jnp.take(last_coors, li, axis=0) - jnp.take(current_coors, ci, axis=0)],
        axis=1)

    h = mlp_fused(x, params["in_linear"])                        # (E, D)
    agg = segment_max_sorted(h, ci, current_coors.shape[0])      # (M, D)
    return mlp_fused(agg, params["out_linear"])                  # (M, out)


# ------------------------------ Pure-JAX reference --------------------------- #
def _ref_mlp(params, x):
    for w, b in params:
        x = jax.nn.relu(jnp.dot(x, w, precision=jax.lax.Precision.HIGHEST) + b)
    return x


def _ref_forward(params, lc, lf, cc, edge):
    ci, li = edge[0], edge[1]
    nf = jnp.concatenate([lf[li], lc[li] - cc[ci]], axis=1)
    nf = _ref_mlp(params["in_linear"], nf)
    agg = jnp.maximum(jax.ops.segment_max(nf, ci, num_segments=cc.shape[0]), 0.0)
    return _ref_mlp(params["out_linear"], agg)


# ----------------------------------- main ----------------------------------- #
if __name__ == "__main__":
    key = jax.random.PRNGKey(0)
    N, M, E = 40, 16, 96                   # last points, current points, edges
    f_last = 13
    in_inter = (f_last + 3, 32, 64)
    out_inter = (64, 32)

    kp, k1, k2, k3, k4, k5 = jax.random.split(key, 6)
    params = init_downsample_block(kp, in_inter, out_inter)

    last_coors = jax.random.normal(k1, (N, 3), jnp.float32)
    last_features = jax.random.normal(k2, (N, f_last), jnp.float32)
    current_coors = jax.random.normal(k3, (M, 3), jnp.float32)
    edge = jnp.stack([jax.random.randint(k4, (E,), 0, M, jnp.int32),
                      jax.random.randint(k5, (E,), 0, N, jnp.int32)], axis=0)

    out = downsample_block_forward(params, last_coors, last_features,
                                   current_coors, edge)
    out = jax.block_until_ready(out)

    ref = _ref_forward(params, last_coors, last_features, current_coors, edge)
    assert out.shape == (M, out_inter[-1]), out.shape
    assert jnp.allclose(out, ref, atol=2e-3, rtol=2e-3), \
        float(jnp.max(jnp.abs(out - ref)))
    print("KERNEL_OK")
</pallas_src>

<mosaic_0001>
module attributes {stable_mosaic.version = 11 : i64} {
  func.func @_fused_mlp_kernel(%arg0: i32, %arg1: memref<96x16xf32, #tpu.memory_space<vmem>>, %arg2: memref<16x32xf32, #tpu.memory_space<vmem>>, %arg3: memref<1x32xf32, #tpu.memory_space<vmem>>, %arg4: memref<32x64xf32, #tpu.memory_space<vmem>>, %arg5: memref<1x64xf32, #tpu.memory_space<vmem>>, %arg6: memref<96x64xf32, #tpu.memory_space<vmem>>) attributes {dimension_semantics = [#tpu.dimension_semantics<parallel>], iteration_bounds = array<i64: 1>, scalar_prefetch = 0 : i64, scratch_operands = 0 : i64, tpu.core_type = #tpu.core_type<tc>, window_params = [{transform_indices = @transform_0, window_bounds = array<i64: 96, 16>}, {pipeline_mode = #tpu.pipeline_mode<synchronous>, transform_indices = @transform_1, window_bounds = array<i64: 16, 32>}, {pipeline_mode = #tpu.pipeline_mode<synchronous>, transform_indices = @transform_2, window_bounds = array<i64: 1, 32>}, {pipeline_mode = #tpu.pipeline_mode<synchronous>, transform_indices = @transform_3, window_bounds = array<i64: 32, 64>}, {pipeline_mode = #tpu.pipeline_mode<synchronous>, transform_indices = @transform_4, window_bounds = array<i64: 1, 64>}, {transform_indices = @transform_5, window_bounds = array<i64: 96, 64>}]} {
    %c0 = arith.constant 0 : index
    %c0_0 = arith.constant 0 : index
    %0 = vector.load %arg1[%c0, %c0_0] : memref<96x16xf32, #tpu.memory_space<vmem>>, vector<96x16xf32>
    %c0_1 = arith.constant 0 : index
    %c0_2 = arith.constant 0 : index
    %1 = vector.load %arg2[%c0_1, %c0_2] : memref<16x32xf32, #tpu.memory_space<vmem>>, vector<16x32xf32>
    %c0_3 = arith.constant 0 : index
    %c0_4 = arith.constant 0 : index
    %2 = vector.load %arg3[%c0_3, %c0_4] : memref<1x32xf32, #tpu.memory_space<vmem>>, vector<1x32xf32>
    %cst = arith.constant dense<0.000000e+00> : vector<96x32xf32>
    %3 = tpu.matmul %0, %1, %cst {dimension_numbers = #tpu.dot_dimension_numbers<[1], [0], [0], [1], [0, 0, 1, 1], [], []>} : vector<96x16xf32>, vector<16x32xf32>, vector<96x32xf32> -> vector<96x32xf32>
    %4 = vector.broadcast %2 : vector<1x32xf32> to vector<96x32xf32>
    %5 = arith.addf %3, %4 : vector<96x32xf32>
    %cst_5 = arith.constant 0.000000e+00 : f32
    %6 = vector.broadcast %cst_5 : f32 to vector<96x32xf32>
    %7 = arith.maximumf %5, %6 : vector<96x32xf32>
    %c0_6 = arith.constant 0 : index
    %c0_7 = arith.constant 0 : index
    %8 = vector.load %arg4[%c0_6, %c0_7] : memref<32x64xf32, #tpu.memory_space<vmem>>, vector<32x64xf32>
    %c0_8 = arith.constant 0 : index
    %c0_9 = arith.constant 0 : index
    %9 = vector.load %arg5[%c0_8, %c0_9] : memref<1x64xf32, #tpu.memory_space<vmem>>, vector<1x64xf32>
    %cst_10 = arith.constant dense<0.000000e+00> : vector<96x64xf32>
    %10 = tpu.matmul %7, %8, %cst_10 {dimension_numbers = #tpu.dot_dimension_numbers<[1], [0], [0], [1], [0, 0, 1, 1], [], []>} : vector<96x32xf32>, vector<32x64xf32>, vector<96x64xf32> -> vector<96x64xf32>
    %11 = vector.broadcast %9 : vector<1x64xf32> to vector<96x64xf32>
    %12 = arith.addf %10, %11 : vector<96x64xf32>
    %cst_11 = arith.constant 0.000000e+00 : f32
    %13 = vector.broadcast %cst_11 : f32 to vector<96x64xf32>
    %14 = arith.maximumf %12, %13 : vector<96x64xf32>
    %c0_12 = arith.constant 0 : index
    %c0_13 = arith.constant 0 : index
    %15 = vector.load %arg6[%c0_12, %c0_13] : memref<96x64xf32, #tpu.memory_space<vmem>>, vector<96x64xf32>
    tpu.vector_store %arg6[%c0_12, %c0_13], %14 {strides = array<i32>} : memref<96x64xf32, #tpu.memory_space<vmem>>, vector<96x64xf32>,
    return
  }
  func.func @transform_0(%arg0: i32) -> (i32, i32) {
    %c0_i32 = arith.constant 0 : i32
    %c0_i32_0 = arith.constant 0 : i32
    return %arg0, %c0_i32 : i32, i32
  }
  func.func @transform_1(%arg0: i32) -> (i32, i32) {
    %c0_i32 = arith.constant 0 : i32
    %c0_i32_0 = arith.constant 0 : i32
    %c0_i32_1 = arith.constant 0 : i32
    return %c0_i32, %c0_i32_0 : i32, i32
  }
  func.func @transform_2(%arg0: i32) -> (i32, i32) {
    %c0_i32 = arith.constant 0 : i32
    %c0_i32_0 = arith.constant 0 : i32
    %c0_i32_1 = arith.constant 0 : i32
    return %c0_i32, %c0_i32_0 : i32, i32
  }
  func.func @transform_3(%arg0: i32) -> (i32, i32) {
    %c0_i32 = arith.constant 0 : i32
    %c0_i32_0 = arith.constant 0 : i32
    %c0_i32_1 = arith.constant 0 : i32
    return %c0_i32, %c0_i32_0 : i32, i32
  }
  func.func @transform_4(%arg0: i32) -> (i32, i32) {
    %c0_i32 = arith.constant 0 : i32
    %c0_i32_0 = arith.constant 0 : i32
    %c0_i32_1 = arith.constant 0 : i32
    return %c0_i32, %c0_i32_0 : i32, i32
  }
  func.func @transform_5(%arg0: i32) -> (i32, i32) {
    %c0_i32 = arith.constant 0 : i32
    %c0_i32_0 = arith.constant 0 : i32
    return %arg0, %c0_i32 : i32, i32
  }
}

</mosaic_0001>

<llo_original>
// kernel: tpu_custom_call.1
$region0: #{tpu_custom_call.1}
  #allocation0 [shape = 'u32[]', space=smem, size = 0x4, offset = 0x4, fixed_abs, tag = 'smem constant byte address 0x4 - core index']
  #allocation1 [shape = 'u32[144,128]{1,0:T(1,128)}', space=vmem, size = 0x12000, scoped, tag = 'internal scratch']
  %s0 = inlined_call_operand.vmem [shape: f32[96,16], index: 0, kind: input, shape index: {}]
  %s1 = inlined_call_operand.vmem [shape: f32[16,32], index: 1, kind: input, shape index: {}]
  %s2 = inlined_call_operand.vmem [shape: f32[1,32], index: 2, kind: input, shape index: {}]
  %s3 = inlined_call_operand.vmem [shape: f32[32,64], index: 3, kind: input, shape index: {}]
  %s4 = inlined_call_operand.vmem [shape: f32[1,64], index: 4, kind: input, shape index: {}]
  %s5 = inlined_call_operand.vmem [shape: f32[96,64], index: 5, kind: output, shape index: {}]
  %s6 = sld [smem:[#allocation0]]
  $region30: #{tpu_custom_call.1} parent=0
    _
  %s8 = ssub.s32 1, %s6
  %s9 = scalar_select 0, %s8, %s6
  // Predicated region
  $region2: #{tpu_custom_call.1} parent=0 // pred_check
    _
  $region3: #{tpu_custom_call.1} parent=0 // pred_check_branch
    %11 = sbr.rel (0) target = $region5
  $region4: #{tpu_custom_call.1} parent=0 // pred_region
    _
  $region5: #{tpu_custom_call.1} parent=0 // pred_fallthru
    _
  // Predicated region
  $region6: #{tpu_custom_call.1} parent=0 // pred_check
    _
  $region7: #{tpu_custom_call.1} parent=0 // pred_check_branch
    %13 = sbr.rel (0) target = $region9
  $region8: #{tpu_custom_call.1} parent=0 // pred_region
    _
  $region9: #{tpu_custom_call.1} parent=0 // pred_fallthru
    _
  // Predicated region
  $region10: #{tpu_custom_call.1} parent=0 // pred_check
    _
  $region11: #{tpu_custom_call.1} parent=0 // pred_check_branch
    %15 = sbr.rel (0) target = $region13
  $region12: #{tpu_custom_call.1} parent=0 // pred_region
    _
  $region13: #{tpu_custom_call.1} parent=0 // pred_fallthru
    _
  // Predicated region
  $region14: #{tpu_custom_call.1} parent=0 // pred_check
    _
  $region15: #{tpu_custom_call.1} parent=0 // pred_check_branch
    %17 = sbr.rel (0) target = $region17
  $region16: #{tpu_custom_call.1} parent=0 // pred_region
    _
  $region17: #{tpu_custom_call.1} parent=0 // pred_fallthru
    _
  // Predicated region
  $region18: #{tpu_custom_call.1} parent=0 // pred_check
    _
  $region19: #{tpu_custom_call.1} parent=0 // pred_check_branch
    %19 = sbr.rel (0) target = $region21
  $region20: #{tpu_custom_call.1} parent=0 // pred_region
    _
  $region21: #{tpu_custom_call.1} parent=0 // pred_fallthru
    _
  %v20 = vld [vmem:[%s0] sm:$0xff]
  %v21 = vld [vmem:[%s0 + $0x8] sm:$0xff]
  %v22 = vld [vmem:[%s0 + $0x10] sm:$0xff]
  %v23 = vld [vmem:[%s0 + $0x18] sm:$0xff]
  %v24 = vld [vmem:[%s0 + $0x20] sm:$0xff]
  %v25 = vld [vmem:[%s0 + $0x28] sm:$0xff]
  %v26 = vld [vmem:[%s0 + $0x30] sm:$0xff]
  %v27 = vld [vmem:[%s0 + $0x38] sm:$0xff]
  %v28 = vld [vmem:[%s0 + $0x40] sm:$0xff]
  %v29 = vld [vmem:[%s0 + $0x48] sm:$0xff]
  %v30 = vld [vmem:[%s0 + $0x50] sm:$0xff]
  %v31 = vld [vmem:[%s0 + $0x58] sm:$0xff]
  %v32 = vld [vmem:[%s1] sm:$0xff]
  %v33 = vld [vmem:[%s1 + $0x8] sm:$0xff]
  %v34 = vld [vmem:[%s2] sm:$0x1]
  %v36 = vlaneseq
  %v37 = vshrl.u32 %v36, 7
  %v38 = vsub.s32 0, %v37
  %v39 = vrot.slane %v34, %v38
  %vm41 = vcmask 130048
  %v43 = vsel %vm41, %v20, 0
  %v46 = vsel %vm41, %v21, 0
  %v49 = vsel %vm41, %v22, 0
  %v52 = vsel %vm41, %v23, 0
  %v55 = vsel %vm41, %v24, 0
  %v58 = vsel %vm41, %v25, 0
  %v61 = vsel %vm41, %v26, 0
  %v64 = vsel %vm41, %v27, 0
  %v67 = vsel %vm41, %v28, 0
  %v70 = vsel %vm41, %v29, 0
  %v73 = vsel %vm41, %v30, 0
  %v76 = vsel %vm41, %v31, 0
  %78 = vmatprep.subr.mxu0 0.0
  %79 = vmatpush1.msra.mxu0 %v32
  %80 = vmatprep.subr.mxu0 0.0
  %81 = vmatpush1.msra.mxu0 %v33
  %82 = vmatprep.subr.mxu0 0.0
  %83 = vmatpush1.msra.mxu0 0.0
  %84 = vmatprep.subr.mxu0 0.0
  %85 = vmatpush1.msra.mxu0 0.0
  %86 = vmatprep.subr.mxu0 0.0
  %87 = vmatpush1.msra.mxu0 0.0
  %88 = vmatprep.subr.mxu0 0.0
  %89 = vmatpush1.msra.mxu0 0.0
  %90 = vmatprep.subr.mxu0 0.0
  %91 = vmatpush1.msra.mxu0 0.0
  %92 = vmatprep.subr.mxu0 0.0
  %93 = vmatpush1.msra.mxu0 0.0
  %94 = vmatprep.subr.mxu0 0.0
  %95 = vmatpush1.msra.mxu0 0.0
  %96 = vmatprep.subr.mxu0 0.0
  %97 = vmatpush1.msra.mxu0 0.0
  %98 = vmatprep.subr.mxu0 0.0
  %99 = vmatpush1.msra.mxu0 0.0
  %100 = vmatprep.subr.mxu0 0.0
  %101 = vmatpush1.msra.mxu0 0.0
  %102 = vmatprep.subr.mxu0 0.0
  %103 = vmatpush1.msra.mxu0 0.0
  %104 = vmatprep.subr.mxu0 0.0
  %105 = vmatpush1.msra.mxu0 0.0
  %106 = vmatprep.subr.mxu0 0.0
  %107 = vmatpush1.msra.mxu0 0.0
  %108 = vmatprep.subr.mxu0 0.0
  %109 = vmatpush1.msra.mxu0 0.0
  %110 = vmatprep.subr.mxu0 0.0
  %111 = vmatpush1.msra.mxu0 0.0
  %112 = vmatprep.subr.mxu0 0.0
  %113 = vmatpush1.msra.mxu0 0.0
  %114 = vmatprep.subr.mxu0 0.0
  %115 = vmatpush1.msra.mxu0 0.0
  %116 = vmatprep.subr.mxu0 0.0
  %117 = vmatpush1.msra.mxu0 0.0
  %118 = vmatprep.subr.mxu0 0.0
  %119 = vmatpush1.msra.mxu0 0.0
  %120 = vmatprep.subr.mxu0 0.0
  %121 = vmatpush1.msra.mxu0 0.0
  %122 = vmatprep.subr.mxu0 0.0
  %123 = vmatpush1.msra.mxu0 0.0
  %124 = vmatprep.subr.mxu0 0.0
  %125 = vmatpush1.msra.mxu0 0.0
  %126 = vmatprep.subr.mxu0 0.0
  %127 = vmatpush1.msra.mxu0 0.0
  %128 = vmatprep.subr.mxu0 0.0
  %129 = vmatpush1.msra.mxu0 0.0
  %130 = vmatprep.subr.mxu0 0.0
  %131 = vmatpush1.msra.mxu0 0.0
  %132 = vmatprep.subr.mxu0 0.0
  %133 = vmatpush1.msra.mxu0 0.0
  %134 = vmatprep.subr.mxu0 0.0
  %135 = vmatpush1.msra.mxu0 0.0
  %136 = vmatprep.subr.mxu0 0.0
  %137 = vmatpush1.msra.mxu0 0.0
  %138 = vmatprep.subr.mxu0 0.0
  %139 = vmatpush1.msra.mxu0 0.0
  %140 = vmatprep.subr.mxu0 0.0
  %141 = vmatpush1.msra.mxu0 0.0
  %142 = vmatprep.mubr.f32.mxu0 0.0
  %143 = vmatmul.mubr.f32.gmra.mrb[0].mxu0 %v43
  %v144 = vpop.f32.mrb[0].mxu0
  %v145 = vadd.f32 %v39, %v144
  %v146 = vpop.f32.mrb[0].mxu0
  %147 = vmatprep.mubr.f32.mxu0 0.0
  %148 = vmatmul.mubr.f32.gmra.mrb[0].mxu0 %v46
  %v149 = vpop.f32.mrb[0].mxu0
  %v150 = vadd.f32 %v39, %v149
  %v151 = vpop.f32.mrb[0].mxu0
  %152 = vmatprep.mubr.f32.mxu0 0.0
  %153 = vmatmul.mubr.f32.gmra.mrb[0].mxu0 %v49
  %v154 = vpop.f32.mrb[0].mxu0
  %v155 = vadd.f32 %v39, %v154
  %v156 = vpop.f32.mrb[0].mxu0
  %157 = vmatprep.mubr.f32.mxu0 0.0
  %158 = vmatmul.mubr.f32.gmra.mrb[0].mxu0 %v52
  %v159 = vpop.f32.mrb[0].mxu0
  %v160 = vadd.f32 %v39, %v159
  %v161 = vpop.f32.mrb[0].mxu0
  %162 = vmatprep.mubr.f32.mxu0 0.0
  %163 = vmatmul.mubr.f32.gmra.mrb[0].mxu0 %v55
  %v164 = vpop.f32.mrb[0].mxu0
  %v165 = vadd.f32 %v39, %v164
  %v166 = vpop.f32.mrb[0].mxu0
  %167 = vmatprep.mubr.f32.mxu0 0.0
  %168 = vmatmul.mubr.f32.gmra.mrb[0].mxu0 %v58
  %v169 = vpop.f32.mrb[0].mxu0
  %v170 = vadd.f32 %v39, %v169
  %v171 = vpop.f32.mrb[0].mxu0
  %172 = vmatprep.mubr.f32.mxu0 0.0
  %173 = vmatmul.mubr.f32.gmra.mrb[0].mxu0 %v61
  %v174 = vpop.f32.mrb[0].mxu0
  %v175 = vadd.f32 %v39, %v174
  %v176 = vpop.f32.mrb[0].mxu0
  %177 = vmatprep.mubr.f32.mxu0 0.0
  %178 = vmatmul.mubr.f32.gmra.mrb[0].mxu0 %v64
  %v179 = vpop.f32.mrb[0].mxu0
  %v180 = vadd.f32 %v39, %v179
  %v181 = vpop.f32.mrb[0].mxu0
  %182 = vmatprep.mubr.f32.mxu0 0.0
  %183 = vmatmul.mubr.f32.gmra.mrb[0].mxu0 %v67
  %v184 = vpop.f32.mrb[0].mxu0
  %v185 = vadd.f32 %v39, %v184
  %v186 = vpop.f32.mrb[0].mxu0
  %187 = vmatprep.mubr.f32.mxu0 0.0
  %188 = vmatmul.mubr.f32.gmra.mrb[0].mxu0 %v70
  %v189 = vpop.f32.mrb[0].mxu0
  %v190 = vadd.f32 %v39, %v189
  %v191 = vpop.f32.mrb[0].mxu0
  %192 = vmatprep.mubr.f32.mxu0 0.0
  %193 = vmatmul.mubr.f32.gmra.mrb[0].mxu0 %v73
  %v194 = vpop.f32.mrb[0].mxu0
  %v195 = vadd.f32 %v39, %v194
  %v196 = vpop.f32.mrb[0].mxu0
  %197 = vmatprep.mubr.f32.mxu0 0.0
  %198 = vmatmul.mubr.f32.gmra.mrb[0].mxu0 %v76
  %v199 = vpop.f32.mrb[0].mxu0
  %v200 = vadd.f32 %v39, %v199
  %v201 = vpop.f32.mrb[0].mxu0
  %202 = vdwg.mxu0
  %v203 = vmax.f32 %v145, 0.0
  %v204 = vmax.f32 %v150, 0.0
  %v205 = vmax.f32 %v155, 0.0
  %v206 = vmax.f32 %v160, 0.0
  %v207 = vmax.f32 %v165, 0.0
  %v208 = vmax.f32 %v170, 0.0
  %v209 = vmax.f32 %v175, 0.0
  %v210 = vmax.f32 %v180, 0.0
  %v211 = vmax.f32 %v185, 0.0
  %v212 = vmax.f32 %v190, 0.0
  %v213 = vmax.f32 %v195, 0.0
  %v214 = vmax.f32 %v200, 0.0
  %v215 = vld [vmem:[%s3] sm:$0xff]
  %v216 = vld [vmem:[%s3 + $0x8] sm:$0xff]
  %v217 = vld [vmem:[%s3 + $0x10] sm:$0xff]
  %v218 = vld [vmem:[%s3 + $0x18] sm:$0xff]
  %v219 = vld [vmem:[%s4] sm:$0x1]
  %v221 = vlaneseq
  %v222 = vshrl.u32 %v221, 7
  %v223 = vsub.s32 0, %v222
  %v224 = vrot.slane %v219, %v223
  %vm226 = vcmask 261120
  %v228 = vsel %vm226, %v203, 0
  %v231 = vsel %vm226, %v204, 0
  %v234 = vsel %vm226, %v205, 0
  %v237 = vsel %vm226, %v206, 0
  %v240 = vsel %vm226, %v207, 0
  %v243 = vsel %vm226, %v208, 0
  %v246 = vsel %vm226, %v209, 0
  %v249 = vsel %vm226, %v210, 0
  %v252 = vsel %vm226, %v211, 0
  %v255 = vsel %vm226, %v212, 0
  %v258 = vsel %vm226, %v213, 0
  %v261 = vsel %vm226, %v214, 0
  %263 = vmatprep.subr.mxu0 0.0
  %264 = vmatpush1.msra.mxu0 %v215
  %265 = vmatprep.subr.mxu0 0.0
  %266 = vmatpush1.msra.mxu0 %v216
  %267 = vmatprep.subr.mxu0 0.0
  %268 = vmatpush1.msra.mxu0 %v217
  %269 = vmatprep.subr.mxu0 0.0
  %270 = vmatpush1.msra.mxu0 %v218
  %271 = vmatprep.subr.mxu0 0.0
  %272 = vmatpush1.msra.mxu0 0.0
  %273 = vmatprep.subr.mxu0 0.0
  %274 = vmatpush1.msra.mxu0 0.0
  %275 = vmatprep.subr.mxu0 0.0
  %276 = vmatpush1.msra.mxu0 0.0
  %277 = vmatprep.subr.mxu0 0.0
  %278 = vmatpush1.msra.mxu0 0.0
  %279 = vmatprep.subr.mxu0 0.0
  %280 = vmatpush1.msra.mxu0 0.0
  %281 = vmatprep.subr.mxu0 0.0
  %282 = vmatpush1.msra.mxu0 0.0
  %283 = vmatprep.subr.mxu0 0.0
  %284 = vmatpush1.msra.mxu0 0.0
  %285 = vmatprep.subr.mxu0 0.0
  %286 = vmatpush1.msra.mxu0 0.0
  %287 = vmatprep.subr.mxu0 0.0
  %288 = vmatpush1.msra.mxu0 0.0
  %289 = vmatprep.subr.mxu0 0.0
  %290 = vmatpush1.msra.mxu0 0.0
  %291 = vmatprep.subr.mxu0 0.0
  %292 = vmatpush1.msra.mxu0 0.0
  %293 = vmatprep.subr.mxu0 0.0
  %294 = vmatpush1.msra.mxu0 0.0
  %295 = vmatprep.subr.mxu0 0.0
  %296 = vmatpush1.msra.mxu0 0.0
  %297 = vmatprep.subr.mxu0 0.0
  %298 = vmatpush1.msra.mxu0 0.0
  %299 = vmatprep.subr.mxu0 0.0
  %300 = vmatpush1.msra.mxu0 0.0
  %301 = vmatprep.subr.mxu0 0.0
  %302 = vmatpush1.msra.mxu0 0.0
  %303 = vmatprep.subr.mxu0 0.0
  %304 = vmatpush1.msra.mxu0 0.0
  %305 = vmatprep.subr.mxu0 0.0
  %306 = vmatpush1.msra.mxu0 0.0
  %307 = vmatprep.subr.mxu0 0.0
  %308 = vmatpush1.msra.mxu0 0.0
  %309 = vmatprep.subr.mxu0 0.0
  %310 = vmatpush1.msra.mxu0 0.0
  %311 = vmatprep.subr.mxu0 0.0
  %312 = vmatpush1.msra.mxu0 0.0
  %313 = vmatprep.subr.mxu0 0.0
  %314 = vmatpush1.msra.mxu0 0.0
  %315 = vmatprep.subr.mxu0 0.0
  %316 = vmatpush1.msra.mxu0 0.0
  %317 = vmatprep.subr.mxu0 0.0
  %318 = vmatpush1.msra.mxu0 0.0
  %319 = vmatprep.subr.mxu0 0.0
  %320 = vmatpush1.msra.mxu0 0.0
  %321 = vmatprep.subr.mxu0 0.0
  %322 = vmatpush1.msra.mxu0 0.0
  %323 = vmatprep.subr.mxu0 0.0
  %324 = vmatpush1.msra.mxu0 0.0
  %325 = vmatprep.subr.mxu0 0.0
  %326 = vmatpush1.msra.mxu0 0.0
  %327 = vmatprep.mubr.f32.mxu0 0.0
  %328 = vmatmul.mubr.f32.gmra.mrb[0].mxu0 %v228
  %v329 = vpop.f32.mrb[0].mxu0
  %v330 = vadd.f32 %v224, %v329
  %v331 = vpop.f32.mrb[0].mxu0
  %332 = vmatprep.mubr.f32.mxu0 0.0
  %333 = vmatmul.mubr.f32.gmra.mrb[0].mxu0 %v231
  %v334 = vpop.f32.mrb[0].mxu0
  %v335 = vadd.f32 %v224, %v334
  %v336 = vpop.f32.mrb[0].mxu0
  %337 = vmatprep.mubr.f32.mxu0 0.0
  %338 = vmatmul.mubr.f32.gmra.mrb[0].mxu0 %v234
  %v339 = vpop.f32.mrb[0].mxu0
  %v340 = vadd.f32 %v224, %v339
  %v341 = vpop.f32.mrb[0].mxu0
  %342 = vmatprep.mubr.f32.mxu0 0.0
  %343 = vmatmul.mubr.f32.gmra.mrb[0].mxu0 %v237
  %v344 = vpop.f32.mrb[0].mxu0
  %v345 = vadd.f32 %v224, %v344
  %v346 = vpop.f32.mrb[0].mxu0
  %347 = vmatprep.mubr.f32.mxu0 0.0
  %348 = vmatmul.mubr.f32.gmra.mrb[0].mxu0 %v240
  %v349 = vpop.f32.mrb[0].mxu0
  %v350 = vadd.f32 %v224, %v349
  %v351 = vpop.f32.mrb[0].mxu0
  %352 = vmatprep.mubr.f32.mxu0 0.0
  %353 = vmatmul.mubr.f32.gmra.mrb[0].mxu0 %v243
  %v354 = vpop.f32.mrb[0].mxu0
  %v355 = vadd.f32 %v224, %v354
  %v356 = vpop.f32.mrb[0].mxu0
  %357 = vmatprep.mubr.f32.mxu0 0.0
  %358 = vmatmul.mubr.f32.gmra.mrb[0].mxu0 %v246
  %v359 = vpop.f32.mrb[0].mxu0
  %v360 = vadd.f32 %v224, %v359
  %v361 = vpop.f32.mrb[0].mxu0
  %362 = vmatprep.mubr.f32.mxu0 0.0
  %363 = vmatmul.mubr.f32.gmra.mrb[0].mxu0 %v249
  %v364 = vpop.f32.mrb[0].mxu0
  %v365 = vadd.f32 %v224, %v364
  %v366 = vpop.f32.mrb[0].mxu0
  %367 = vmatprep.mubr.f32.mxu0 0.0
  %368 = vmatmul.mubr.f32.gmra.mrb[0].mxu0 %v252
  %v369 = vpop.f32.mrb[0].mxu0
  %v370 = vadd.f32 %v224, %v369
  %v371 = vpop.f32.mrb[0].mxu0
  %372 = vmatprep.mubr.f32.mxu0 0.0
  %373 = vmatmul.mubr.f32.gmra.mrb[0].mxu0 %v255
  %v374 = vpop.f32.mrb[0].mxu0
  %v375 = vadd.f32 %v224, %v374
  %v376 = vpop.f32.mrb[0].mxu0
  %377 = vmatprep.mubr.f32.mxu0 0.0
  %378 = vmatmul.mubr.f32.gmra.mrb[0].mxu0 %v258
  %v379 = vpop.f32.mrb[0].mxu0
  %v380 = vadd.f32 %v224, %v379
  %v381 = vpop.f32.mrb[0].mxu0
  %382 = vmatprep.mubr.f32.mxu0 0.0
  %383 = vmatmul.mubr.f32.gmra.mrb[0].mxu0 %v261
  %v384 = vpop.f32.mrb[0].mxu0
  %v385 = vadd.f32 %v224, %v384
  %v386 = vpop.f32.mrb[0].mxu0
  %387 = vdwg.mxu0
  %v388 = vmax.f32 %v330, 0.0
  %v389 = vmax.f32 %v335, 0.0
  %v390 = vmax.f32 %v340, 0.0
  %v391 = vmax.f32 %v345, 0.0
  %v392 = vmax.f32 %v350, 0.0
  %v393 = vmax.f32 %v355, 0.0
  %v394 = vmax.f32 %v360, 0.0
  %v395 = vmax.f32 %v365, 0.0
  %v396 = vmax.f32 %v370, 0.0
  %v397 = vmax.f32 %v375, 0.0
  %v398 = vmax.f32 %v380, 0.0
  %v399 = vmax.f32 %v385, 0.0
  %vm400 = vcmask 523264
  %401 = vst.msk [vmem:[%s5] sm:$0xff] %vm400, %v388
  %402 = vst.msk [vmem:[%s5 + $0x8] sm:$0xff] %vm400, %v389
  %403 = vst.msk [vmem:[%s5 + $0x10] sm:$0xff] %vm400, %v390
  %404 = vst.msk [vmem:[%s5 + $0x18] sm:$0xff] %vm400, %v391
  %405 = vst.msk [vmem:[%s5 + $0x20] sm:$0xff] %vm400, %v392
  %406 = vst.msk [vmem:[%s5 + $0x28] sm:$0xff] %vm400, %v393
  %407 = vst.msk [vmem:[%s5 + $0x30] sm:$0xff] %vm400, %v394
  %408 = vst.msk [vmem:[%s5 + $0x38] sm:$0xff] %vm400, %v395
  %409 = vst.msk [vmem:[%s5 + $0x40] sm:$0xff] %vm400, %v396
  %410 = vst.msk [vmem:[%s5 + $0x48] sm:$0xff] %vm400, %v397
  %411 = vst.msk [vmem:[%s5 + $0x50] sm:$0xff] %vm400, %v398
  %412 = vst.msk [vmem:[%s5 + $0x58] sm:$0xff] %vm400, %v399
  // Predicated region
  $region22: #{tpu_custom_call.1} parent=0 // pred_check
    _
  $region23: #{tpu_custom_call.1} parent=0 // pred_check_branch
    %414 = sbr.rel (0) target = $region25
  $region24: #{tpu_custom_call.1} parent=0 // pred_region
    _
  $region25: #{tpu_custom_call.1} parent=0 // pred_fallthru
    _
  // Predicated region
  $region26: #{tpu_custom_call.1} parent=0 // pred_check
    _
  $region27: #{tpu_custom_call.1} parent=0 // pred_check_branch
    %416 = sbr.rel (0) target = $region29
  $region28: #{tpu_custom_call.1} parent=0 // pred_region
    _
  $region29: #{tpu_custom_call.1} parent=0 // pred_fallthru
    _

</llo_original>
